<compile_context>
chip_gen: v6e
topology: v6e:2x2x1
jax: 0.10.0
libtpu: 0.0.40
codegen_flags: <defaults>
</compile_context>

<pallas_src>
import functools

import jax
import jax.numpy as jnp
from jax.experimental import pallas as pl
from jax.experimental.pallas import tpu as pltpu

LANE = 128
SUBLANE = 8


def _round_up(n, m):
    return ((n + m - 1) // m) * m


def mlp_kernel(x_ref, w1_ref, b1_ref, w2_ref, b2_ref, o_ref):
    # fc1: (B_tile, In) @ (In, H) + (1, H) -> ReLU   (f32 accumulation)
    x = x_ref[...].astype(w1_ref.dtype)
    h = jnp.dot(x, w1_ref[...], preferred_element_type=jnp.float32)
    h = jnp.maximum(h + b1_ref[...], 0.0)
    # fc2: (B_tile, H) @ (H, Out_p) + (1, Out_p)
    y = jnp.dot(h.astype(w2_ref.dtype), w2_ref[...],
                preferred_element_type=jnp.float32)
    o_ref[...] = (y + b2_ref[...]).astype(o_ref.dtype)


def prepare_params(w1, b1, w2, b2, *, compute_dtype=jnp.bfloat16):
    """One-time (init-side) parameter preparation.

    Casts weights to the matmul input dtype (bf16 by default: MXU-native on
    v5e/v6e/v7x; accumulation stays f32 in-kernel) and pads ONLY the output
    feature dimension to a multiple of 128 for lane-dense stores.  This runs
    once, outside the per-call hot path.
    """
    In, H = w1.shape
    Out = w2.shape[1]
    Out_p = _round_up(Out, LANE)

    w1_p = w1.astype(compute_dtype)                       # (In, H)  — no padding
    b1_p = b1.astype(jnp.float32).reshape(1, H)           # (1, H)   — f32 epilogue
    w2_p = jnp.zeros((H, Out_p), compute_dtype).at[:, :Out].set(
        w2.astype(compute_dtype))                         # (H, Out_p)
    b2_p = jnp.zeros((1, Out_p), jnp.float32).at[0, :Out].set(
        b2.astype(jnp.float32))                           # (1, Out_p)
    return (w1_p, b1_p, w2_p, b2_p, Out)


def simple_model_forward(x, params, *, tile_b=None):
    """Fused forward pass: relu(x @ w1 + b1) @ w2 + b2.

    x      : (B, In), any float dtype (cast to the weight dtype in-kernel).
    params : output of prepare_params().
    """
    w1_p, b1_p, w2_p, b2_p, out_features = params
    B, In = x.shape
    H = w1_p.shape[1]
    Out_p = w2_p.shape[1]
    assert w1_p.shape[0] == In, "x / w1 feature-size mismatch"

    w_itemsize = jnp.dtype(w1_p.dtype).itemsize
    x_itemsize = jnp.dtype(x.dtype).itemsize

    # --- batch tiling ---------------------------------------------------
    if tile_b is None:
        tile_b = 1024 if w_itemsize <= 2 else 512
    tile_b = max(SUBLANE, _round_up(tile_b, SUBLANE))
    B_tile = min(tile_b, _round_up(B, SUBLANE))
    # v7x has 2 TensorCores: make sure the "parallel" batch axis has >= 2
    # steps whenever the batch allows it (no-op for tiny B, and for v5e/v6e).
    if B > SUBLANE and _round_up(B, B_tile) // B_tile < 2:
        B_tile = _round_up(pl.cdiv(B, 2), SUBLANE)
    B_p = _round_up(B, B_tile)
    grid = (B_p // B_tile,)

    # Pad batch rows only when actually needed (x's In dim is never padded).
    x_in = x
    if B_p != B:
        x_in = jnp.zeros((B_p, In), x.dtype).at[:B].set(x)

    # --- VMEM budget / cost hint -----------------------------------------
    w_bytes = (w1_p.size + w2_p.size) * w_itemsize + (b1_p.size + b2_p.size) * 4
    x_tile_bytes = B_tile * In * x_itemsize
    out_tile_bytes = B_tile * Out_p * x_itemsize
    # Everything is double-buffered by the auto-pipeliner.
    vmem_bytes = 2 * (x_tile_bytes + out_tile_bytes + w_bytes)
    vmem_limit = int(min(64 << 20, max(32 << 20, 2 * vmem_bytes)))

    flops = 2 * B_p * (In * H + H * Out_p)
    bytes_accessed = B_p * In * x_itemsize + w_bytes + B_p * Out_p * x_itemsize

    out = pl.pallas_call(
        mlp_kernel,
        out_shape=jax.ShapeDtypeStruct((B_p, Out_p), x.dtype),
        grid=grid,
        in_specs=[
            pl.BlockSpec((B_tile, In), lambda i: (i, 0)),   # x: tiled on batch
            pl.BlockSpec((In, H), lambda i: (0, 0)),        # w1: VMEM-resident
            pl.BlockSpec((1, H), lambda i: (0, 0)),         # b1: VMEM-resident
            pl.BlockSpec((H, Out_p), lambda i: (0, 0)),     # w2: VMEM-resident
            pl.BlockSpec((1, Out_p), lambda i: (0, 0)),     # b2: VMEM-resident
        ],
        out_specs=pl.BlockSpec((B_tile, Out_p), lambda i: (i, 0)),
        compiler_params=pltpu.CompilerParams(
            dimension_semantics=("parallel",),   # shard batch tiles across TCs
            vmem_limit_bytes=vmem_limit,
        ),
        cost_estimate=pl.CostEstimate(
            flops=flops, transcendentals=0, bytes_accessed=bytes_accessed),
    )(x_in, w1_p, b1_p, w2_p, b2_p)

    # Slice back to the logical (B, Out) only when anything was padded.
    if B_p != B or Out_p != out_features:
        out = out[:B, :out_features]
    return out


def init_params(key, input_size, hidden_size, output_size):
    """Deterministic synthetic parameters (PyTorch-style uniform init)."""
    k1, k2, k3, k4 = jax.random.split(key, 4)
    bound1 = 1.0 / jnp.sqrt(input_size)
    bound2 = 1.0 / jnp.sqrt(hidden_size)
    # Stored as (in, out) = torch weight .T
    w1 = jax.random.uniform(k1, (input_size, hidden_size), jnp.float32,
                            -bound1, bound1)
    b1 = jax.random.uniform(k2, (hidden_size,), jnp.float32, -bound1, bound1)
    w2 = jax.random.uniform(k3, (hidden_size, output_size), jnp.float32,
                            -bound2, bound2)
    b2 = jax.random.uniform(k4, (output_size,), jnp.float32, -bound2, bound2)
    return w1, b1, w2, b2


if __name__ == "__main__":
    key = jax.random.PRNGKey(0)
    kx, kx2, kp = jax.random.split(key, 3)

    batch = 8
    input_size = 32
    hidden_size = 64
    output_size = 16

    x = jax.random.normal(kx, (batch, input_size), jnp.float32)
    w1, b1, w2, b2 = init_params(kp, input_size, hidden_size, output_size)
    ref = jnp.maximum(x @ w1 + b1, 0.0) @ w2 + b2

    # --- f32 matmul-input path: exact-tolerance check --------------------
    params_f32 = prepare_params(w1, b1, w2, b2, compute_dtype=jnp.float32)
    out = jax.block_until_ready(simple_model_forward(x, params_f32))
    assert out.shape == (batch, output_size)
    assert jnp.allclose(out, ref, atol=1e-5, rtol=1e-5)

    # --- production default path: bf16 matmul inputs, f32 accumulation ---
    params_bf16 = prepare_params(w1, b1, w2, b2)   # compute_dtype=bf16
    out_bf16 = jax.block_until_ready(simple_model_forward(x, params_bf16))
    assert out_bf16.shape == (batch, output_size)
    assert jnp.allclose(out_bf16, ref, atol=1e-1, rtol=1e-1)

    # --- multi-step batch grid (exercises the "parallel" axis, >=2 steps) -
    batch2 = 48
    x2 = jax.random.normal(kx2, (batch2, input_size), jnp.float32)
    ref2 = jnp.maximum(x2 @ w1 + b1, 0.0) @ w2 + b2
    out2 = jax.block_until_ready(simple_model_forward(x2, params_f32))
    assert out2.shape == (batch2, output_size)
    assert jnp.allclose(out2, ref2, atol=1e-5, rtol=1e-5)

    print("KERNEL_OK")
</pallas_src>

<mosaic_0001>
module attributes {stable_mosaic.version = 11 : i64} {
  func.func @mlp_kernel(%arg0: i32, %arg1: memref<8x32xf32, #tpu.memory_space<vmem>>, %arg2: memref<32x64xf32, #tpu.memory_space<vmem>>, %arg3: memref<1x64xf32, #tpu.memory_space<vmem>>, %arg4: memref<64x128xf32, #tpu.memory_space<vmem>>, %arg5: memref<1x128xf32, #tpu.memory_space<vmem>>, %arg6: memref<8x128xf32, #tpu.memory_space<vmem>>) attributes {dimension_semantics = [#tpu.dimension_semantics<parallel>], iteration_bounds = array<i64: 1>, scalar_prefetch = 0 : i64, scratch_operands = 0 : i64, tpu.core_type = #tpu.core_type<tc>, window_params = [{transform_indices = @transform_0, window_bounds = array<i64: 8, 32>}, {pipeline_mode = #tpu.pipeline_mode<synchronous>, transform_indices = @transform_1, window_bounds = array<i64: 32, 64>}, {pipeline_mode = #tpu.pipeline_mode<synchronous>, transform_indices = @transform_2, window_bounds = array<i64: 1, 64>}, {pipeline_mode = #tpu.pipeline_mode<synchronous>, transform_indices = @transform_3, window_bounds = array<i64: 64, 128>}, {pipeline_mode = #tpu.pipeline_mode<synchronous>, transform_indices = @transform_4, window_bounds = array<i64: 1, 128>}, {transform_indices = @transform_5, window_bounds = array<i64: 8, 128>}]} {
    %c0 = arith.constant 0 : index
    %c0_0 = arith.constant 0 : index
    %0 = vector.load %arg1[%c0, %c0_0] : memref<8x32xf32, #tpu.memory_space<vmem>>, vector<8x32xf32>
    %c0_1 = arith.constant 0 : index
    %c0_2 = arith.constant 0 : index
    %1 = vector.load %arg2[%c0_1, %c0_2] : memref<32x64xf32, #tpu.memory_space<vmem>>, vector<32x64xf32>
    %cst = arith.constant dense<0.000000e+00> : vector<8x64xf32>
    %2 = tpu.matmul %0, %1, %cst {dimension_numbers = #tpu.dot_dimension_numbers<[1], [0], [0], [1], [0, 0, 1, 1], [], []>} : vector<8x32xf32>, vector<32x64xf32>, vector<8x64xf32> -> vector<8x64xf32>
    %c0_3 = arith.constant 0 : index
    %c0_4 = arith.constant 0 : index
    %3 = vector.load %arg3[%c0_3, %c0_4] : memref<1x64xf32, #tpu.memory_space<vmem>>, vector<1x64xf32>
    %4 = vector.broadcast %3 : vector<1x64xf32> to vector<8x64xf32>
    %5 = arith.addf %2, %4 : vector<8x64xf32>
    %cst_5 = arith.constant 0.000000e+00 : f32
    %6 = vector.broadcast %cst_5 : f32 to vector<8x64xf32>
    %7 = arith.maximumf %5, %6 : vector<8x64xf32>
    %c0_6 = arith.constant 0 : index
    %c0_7 = arith.constant 0 : index
    %8 = vector.load %arg4[%c0_6, %c0_7] : memref<64x128xf32, #tpu.memory_space<vmem>>, vector<64x128xf32>
    %cst_8 = arith.constant dense<0.000000e+00> : vector<8x128xf32>
    %9 = tpu.matmul %7, %8, %cst_8 {dimension_numbers = #tpu.dot_dimension_numbers<[1], [0], [0], [1], [0, 0, 1, 1], [], []>} : vector<8x64xf32>, vector<64x128xf32>, vector<8x128xf32> -> vector<8x128xf32>
    %c0_9 = arith.constant 0 : index
    %c0_10 = arith.constant 0 : index
    %10 = vector.load %arg5[%c0_9, %c0_10] : memref<1x128xf32, #tpu.memory_space<vmem>>, vector<1x128xf32>
    %11 = vector.broadcast %10 : vector<1x128xf32> to vector<8x128xf32>
    %12 = arith.addf %9, %11 : vector<8x128xf32>
    %c0_11 = arith.constant 0 : index
    %c0_12 = arith.constant 0 : index
    %13 = vector.load %arg6[%c0_11, %c0_12] : memref<8x128xf32, #tpu.memory_space<vmem>>, vector<8x128xf32>
    tpu.vector_store %arg6[%c0_11, %c0_12], %12 {strides = array<i32>} : memref<8x128xf32, #tpu.memory_space<vmem>>, vector<8x128xf32>,
    return
  }
  func.func @transform_0(%arg0: i32) -> (i32, i32) {
    %c0_i32 = arith.constant 0 : i32
    %c0_i32_0 = arith.constant 0 : i32
    return %arg0, %c0_i32 : i32, i32
  }
  func.func @transform_1(%arg0: i32) -> (i32, i32) {
    %c0_i32 = arith.constant 0 : i32
    %c0_i32_0 = arith.constant 0 : i32
    %c0_i32_1 = arith.constant 0 : i32
    return %c0_i32, %c0_i32_0 : i32, i32
  }
  func.func @transform_2(%arg0: i32) -> (i32, i32) {
    %c0_i32 = arith.constant 0 : i32
    %c0_i32_0 = arith.constant 0 : i32
    %c0_i32_1 = arith.constant 0 : i32
    return %c0_i32, %c0_i32_0 : i32, i32
  }
  func.func @transform_3(%arg0: i32) -> (i32, i32) {
    %c0_i32 = arith.constant 0 : i32
    %c0_i32_0 = arith.constant 0 : i32
    %c0_i32_1 = arith.constant 0 : i32
    return %c0_i32, %c0_i32_0 : i32, i32
  }
  func.func @transform_4(%arg0: i32) -> (i32, i32) {
    %c0_i32 = arith.constant 0 : i32
    %c0_i32_0 = arith.constant 0 : i32
    %c0_i32_1 = arith.constant 0 : i32
    return %c0_i32, %c0_i32_0 : i32, i32
  }
  func.func @transform_5(%arg0: i32) -> (i32, i32) {
    %c0_i32 = arith.constant 0 : i32
    %c0_i32_0 = arith.constant 0 : i32
    return %arg0, %c0_i32 : i32, i32
  }
}

</mosaic_0001>

<llo_original>
// kernel: tpu_custom_call.1
$region0: #{tpu_custom_call.1}
  #allocation0 [shape = 'u32[]', space=smem, size = 0x4, offset = 0x4, fixed_abs, tag = 'smem constant byte address 0x4 - core index']
  #allocation1 [shape = 'u32[144,128]{1,0:T(1,128)}', space=vmem, size = 0x12000, scoped, tag = 'internal scratch']
  %s0 = inlined_call_operand.hbm [shape: f32[8,32], index: 0, kind: input, shape index: {}]
  %s1 = inlined_call_operand.hbm [shape: f32[32,64], index: 1, kind: input, shape index: {}]
  %s2 = inlined_call_operand.vmem [shape: f32[1,64], index: 2, kind: input, shape index: {}]
  %s3 = inlined_call_operand.hbm [shape: f32[64,128], index: 3, kind: input, shape index: {}]
  %s4 = inlined_call_operand.vmem [shape: f32[1,128], index: 4, kind: input, shape index: {}]
  %s5 = inlined_call_operand.hbm [shape: f32[8,128], index: 5, kind: output, shape index: {}]
  %s6 = sld [smem:[#allocation0]]
  $region42: #{tpu_custom_call.1} parent=0
    _
  %s8 = ssub.s32 1, %s6
  %s9 = scalar_select 0, %s8, %s6
  $region1: #{tpu_custom_call.1} parent=0
    #allocation2 [shape = 'u8[4096]{0}', space=vmem, size = 0x1000, scoped, tag = 'input window, operand 0, single buffered']
    #allocation3 [shape = 's32[1]{0}', space=sflag, size = 0x4, scoped, tag = 'scoped memory for tpu_custom_call.1']
    #allocation4 [shape = 's32[1]{0}', space=sflag, size = 0x4, scoped, tag = 'scoped memory for tpu_custom_call.1']
    #allocation5 [shape = 'u8[16384]{0}', space=vmem, size = 0x4000, scoped, tag = 'input window, operand 1, single buffered']
    #allocation6 [shape = 's32[1]{0}', space=sflag, size = 0x4, scoped, tag = 'scoped memory for tpu_custom_call.1']
    #allocation7 [shape = 'u8[32768]{0}', space=vmem, size = 0x8000, scoped, tag = 'input window, operand 3, single buffered']
    #allocation8 [shape = 'u8[4096]{0}', space=vmem, size = 0x1000, scoped, tag = 'output window, operand 0, single buffered']
    %10 = vsyncpa [#allocation3], 0
    %11 = vsyncpa [#allocation6], 0
    %12 = vsyncpa [#allocation4], 0
    // Predicated region
    $region2: #{tpu_custom_call.1} parent=1 // pred_check
      _
    $region3: #{tpu_custom_call.1} parent=1 // pred_check_branch
      %14 = sbr.rel (0) target = $region5
    $region4: #{tpu_custom_call.1} parent=1 // pred_region
      %s16 = ssub.s32 128, 128
      %17 = vsyncadd [#allocation3], %s16
      %s19 = sshll.u32 [#allocation2], 4
      %s20 = int_to_ptr.vmem [resolvable:$true] %s19
      %22 = dma.hbm_to_vmem [thread:$0]  %s0, 128, %s20, [#allocation3]
    $region5: #{tpu_custom_call.1} parent=1 // pred_fallthru
      _
    // Predicated region
    $region6: #{tpu_custom_call.1} parent=1 // pred_check
      _
    $region7: #{tpu_custom_call.1} parent=1 // pred_check_branch
      %24 = sbr.rel (0) target = $region9
    $region8: #{tpu_custom_call.1} parent=1 // pred_region
      %s26 = ssub.s32 512, 512
      %27 = vsyncadd [#allocation6], %s26
      %s28 = sshll.u32 [#allocation5], 4
      %s29 = int_to_ptr.vmem [resolvable:$true] %s28
      %34 = dma.hbm_to_vmem [thread:$0]  %s1, 512, %s29, [#allocation6], 128, 128, 8
    $region9: #{tpu_custom_call.1} parent=1 // pred_fallthru
      _
    // Predicated region
    $region10: #{tpu_custom_call.1} parent=1 // pred_check
      _
    $region11: #{tpu_custom_call.1} parent=1 // pred_check_branch
      %36 = sbr.rel (0) target = $region13
    $region12: #{tpu_custom_call.1} parent=1 // pred_region
      _
    $region13: #{tpu_custom_call.1} parent=1 // pred_fallthru
      _
    // Predicated region
    $region14: #{tpu_custom_call.1} parent=1 // pred_check
      _
    $region15: #{tpu_custom_call.1} parent=1 // pred_check_branch
      %38 = sbr.rel (0) target = $region17
    $region16: #{tpu_custom_call.1} parent=1 // pred_region
      %s40 = ssub.s32 1024, 1024
      %41 = vsyncadd [#allocation6], %s40
      %s42 = sshll.u32 [#allocation7], 4
      %s43 = int_to_ptr.vmem [resolvable:$true] %s42
      %48 = dma.hbm_to_vmem [thread:$0]  %s3, 1024, %s43, [#allocation6], 128, 128, 8
    $region17: #{tpu_custom_call.1} parent=1 // pred_fallthru
      _
    // Predicated region
    $region18: #{tpu_custom_call.1} parent=1 // pred_check
      _
    $region19: #{tpu_custom_call.1} parent=1 // pred_check_branch
      %50 = sbr.rel (0) target = $region21
    $region20: #{tpu_custom_call.1} parent=1 // pred_region
      _
    $region21: #{tpu_custom_call.1} parent=1 // pred_fallthru
      _
    // Predicated region
    $region22: #{tpu_custom_call.1} parent=1 // pred_check
      _
    $region23: #{tpu_custom_call.1} parent=1 // pred_check_branch
      %52 = sbr.rel (0) target = $region25
    $region24: #{tpu_custom_call.1} parent=1 // pred_region
      %53 = dma.done [#allocation3], 128
    $region25: #{tpu_custom_call.1} parent=1 // pred_fallthru
      _
    // Predicated region
    $region26: #{tpu_custom_call.1} parent=1 // pred_check
      _
    $region27: #{tpu_custom_call.1} parent=1 // pred_check_branch
      %55 = sbr.rel (0) target = $region29
    $region28: #{tpu_custom_call.1} parent=1 // pred_region
      %56 = dma.done [#allocation6], 512
    $region29: #{tpu_custom_call.1} parent=1 // pred_fallthru
      _
    // Predicated region
    $region30: #{tpu_custom_call.1} parent=1 // pred_check
      _
    $region31: #{tpu_custom_call.1} parent=1 // pred_check_branch
      %58 = sbr.rel (0) target = $region33
    $region32: #{tpu_custom_call.1} parent=1 // pred_region
      %59 = dma.done [#allocation6], 1024
    $region33: #{tpu_custom_call.1} parent=1 // pred_fallthru
      _
    %v60 = vld [vmem:[#allocation2] sm:$0xff]
    %v61 = vld [vmem:[#allocation5] sm:$0xff]
    %v62 = vld [vmem:[#allocation5 + $0x8] sm:$0xff]
    %v63 = vld [vmem:[#allocation5 + $0x10] sm:$0xff]
    %v64 = vld [vmem:[#allocation5 + $0x18] sm:$0xff]
    %v65 = vld [vmem:[%s2] sm:$0x1]
    %v67 = vlaneseq
    %v68 = vshrl.u32 %v67, 7
    %v69 = vsub.s32 0, %v68
    %v70 = vrot.slane %v65, %v69
    %vm72 = vcmask 261120
    %v74 = vsel %vm72, %v60, 0
    %76 = vmatprep.subr.mxu0 0.0
    %77 = vmatpush1.msra.mxu0 0.0
    %78 = vmatprep.subr.mxu0 0.0
    %79 = vmatpush1.msra.mxu0 0.0
    %80 = vmatprep.subr.mxu0 0.0
    %81 = vmatpush1.msra.mxu0 0.0
    %82 = vmatprep.subr.mxu0 0.0
    %83 = vmatpush1.msra.mxu0 0.0
    %84 = vmatprep.subr.mxu0 0.0
    %85 = vmatpush1.msra.mxu0 0.0
    %86 = vmatprep.subr.mxu0 0.0
    %87 = vmatpush1.msra.mxu0 0.0
    %88 = vmatprep.subr.mxu0 0.0
    %89 = vmatpush1.msra.mxu0 0.0
    %90 = vmatprep.subr.mxu0 0.0
    %91 = vmatpush1.msra.mxu0 0.0
    %92 = vmatprep.subr.mxu0 0.0
    %93 = vmatpush1.msra.mxu0 0.0
    %94 = vmatprep.subr.mxu0 0.0
    %95 = vmatpush1.msra.mxu0 0.0
    %96 = vmatprep.subr.mxu0 0.0
    %97 = vmatpush1.msra.mxu0 0.0
    %98 = vmatprep.subr.mxu0 0.0
    %99 = vmatpush1.msra.mxu0 0.0
    %100 = vmatprep.subr.mxu0 0.0
    %101 = vmatpush1.msra.mxu0 %v64
    %102 = vmatprep.subr.mxu0 0.0
    %103 = vmatpush1.msra.mxu0 %v63
    %104 = vmatprep.subr.mxu0 0.0
    %105 = vmatpush1.msra.mxu0 %v62
    %106 = vmatprep.subr.mxu0 0.0
    %107 = vmatpush1.msra.mxu0 %v61
    %108 = vmatprep.subr.mxu0 0.0
    %109 = vmatpush2.msra.mxu0 0.0
    %110 = vmatprep.subr.mxu0 0.0
    %111 = vmatpush2.msra.mxu0 0.0
    %112 = vmatprep.subr.mxu0 0.0
    %113 = vmatpush2.msra.mxu0 0.0
    %114 = vmatprep.subr.mxu0 0.0
    %115 = vmatpush2.msra.mxu0 0.0
    %116 = vmatprep.subr.mxu0 0.0
    %117 = vmatpush2.msra.mxu0 0.0
    %118 = vmatprep.subr.mxu0 0.0
    %119 = vmatpush2.msra.mxu0 0.0
    %120 = vmatprep.subr.mxu0 0.0
    %121 = vmatpush2.msra.mxu0 0.0
    %122 = vmatprep.subr.mxu0 0.0
    %123 = vmatpush2.msra.mxu0 0.0
    %124 = vmatprep.subr.mxu0 0.0
    %125 = vmatpush2.msra.mxu0 0.0
    %126 = vmatprep.subr.mxu0 0.0
    %127 = vmatpush2.msra.mxu0 0.0
    %128 = vmatprep.subr.mxu0 0.0
    %129 = vmatpush2.msra.mxu0 0.0
    %130 = vmatprep.subr.mxu0 0.0
    %131 = vmatpush2.msra.mxu0 0.0
    %132 = vmatprep.subr.mxu0 0.0
    %133 = vmatpush2.msra.mxu0 0.0
    %134 = vmatprep.subr.mxu0 0.0
    %135 = vmatpush2.msra.mxu0 0.0
    %136 = vmatprep.subr.mxu0 0.0
    %137 = vmatpush2.msra.mxu0 0.0
    %138 = vmatprep.subr.mxu0 0.0
    %139 = vmatpush2.msra.mxu0 0.0
    %140 = vmatprep.mubr.f32.mxu0 0.0
    %141 = vmatmul.mubr.f32.gmra.mxu0 %v74
    %v142 = vpop.f32.mrf.mxu0
    %v143 = vadd.f32 %v70, %v142
    %v144 = vpop.f32.mrf.mxu0
    %145 = vdwg.mxu0
    %v146 = vmax.f32 %v143, 0.0
    %v147 = vld [vmem:[#allocation7] sm:$0xff]
    %v148 = vld [vmem:[#allocation7 + $0x8] sm:$0xff]
    %v149 = vld [vmem:[#allocation7 + $0x10] sm:$0xff]
    %v150 = vld [vmem:[#allocation7 + $0x18] sm:$0xff]
    %v151 = vld [vmem:[#allocation7 + $0x20] sm:$0xff]
    %v152 = vld [vmem:[#allocation7 + $0x28] sm:$0xff]
    %v153 = vld [vmem:[#allocation7 + $0x30] sm:$0xff]
    %v154 = vld [vmem:[#allocation7 + $0x38] sm:$0xff]
    %v155 = vld [vmem:[%s4] sm:$0x1]
    %v157 = vlaneseq
    %v158 = vshrl.u32 %v157, 7
    %v159 = vsub.s32 0, %v158
    %v160 = vrot.slane %v155, %v159
    %vm162 = vcmask 523264
    %v164 = vsel %vm162, %v146, 0
    %166 = vmatprep.subr.mxu0 0.0
    %167 = vmatpush1.msra.mxu0 0.0
    %168 = vmatprep.subr.mxu0 0.0
    %169 = vmatpush1.msra.mxu0 0.0
    %170 = vmatprep.subr.mxu0 0.0
    %171 = vmatpush1.msra.mxu0 0.0
    %172 = vmatprep.subr.mxu0 0.0
    %173 = vmatpush1.msra.mxu0 0.0
    %174 = vmatprep.subr.mxu0 0.0
    %175 = vmatpush1.msra.mxu0 0.0
    %176 = vmatprep.subr.mxu0 0.0
    %177 = vmatpush1.msra.mxu0 0.0
    %178 = vmatprep.subr.mxu0 0.0
    %179 = vmatpush1.msra.mxu0 0.0
    %180 = vmatprep.subr.mxu0 0.0
    %181 = vmatpush1.msra.mxu0 0.0
    %182 = vmatprep.subr.mxu0 0.0
    %183 = vmatpush1.msra.mxu0 %v154
    %184 = vmatprep.subr.mxu0 0.0
    %185 = vmatpush1.msra.mxu0 %v153
    %186 = vmatprep.subr.mxu0 0.0
    %187 = vmatpush1.msra.mxu0 %v152
    %188 = vmatprep.subr.mxu0 0.0
    %189 = vmatpush1.msra.mxu0 %v151
    %190 = vmatprep.subr.mxu0 0.0
    %191 = vmatpush1.msra.mxu0 %v150
    %192 = vmatprep.subr.mxu0 0.0
    %193 = vmatpush1.msra.mxu0 %v149
    %194 = vmatprep.subr.mxu0 0.0
    %195 = vmatpush1.msra.mxu0 %v148
    %196 = vmatprep.subr.mxu0 0.0
    %197 = vmatpush1.msra.mxu0 %v147
    %198 = vmatprep.subr.mxu0 0.0
    %199 = vmatpush2.msra.mxu0 0.0
    %200 = vmatprep.subr.mxu0 0.0
    %201 = vmatpush2.msra.mxu0 0.0
    %202 = vmatprep.subr.mxu0 0.0
    %203 = vmatpush2.msra.mxu0 0.0
    %204 = vmatprep.subr.mxu0 0.0
    %205 = vmatpush2.msra.mxu0 0.0
    %206 = vmatprep.subr.mxu0 0.0
    %207 = vmatpush2.msra.mxu0 0.0
    %208 = vmatprep.subr.mxu0 0.0
    %209 = vmatpush2.msra.mxu0 0.0
    %210 = vmatprep.subr.mxu0 0.0
    %211 = vmatpush2.msra.mxu0 0.0
    %212 = vmatprep.subr.mxu0 0.0
    %213 = vmatpush2.msra.mxu0 0.0
    %214 = vmatprep.subr.mxu0 0.0
    %215 = vmatpush2.msra.mxu0 0.0
    %216 = vmatprep.subr.mxu0 0.0
    %217 = vmatpush2.msra.mxu0 0.0
    %218 = vmatprep.subr.mxu0 0.0
    %219 = vmatpush2.msra.mxu0 0.0
    %220 = vmatprep.subr.mxu0 0.0
    %221 = vmatpush2.msra.mxu0 0.0
    %222 = vmatprep.subr.mxu0 0.0
    %223 = vmatpush2.msra.mxu0 0.0
    %224 = vmatprep.subr.mxu0 0.0
    %225 = vmatpush2.msra.mxu0 0.0
    %226 = vmatprep.subr.mxu0 0.0
    %227 = vmatpush2.msra.mxu0 0.0
    %228 = vmatprep.subr.mxu0 0.0
    %229 = vmatpush2.msra.mxu0 0.0
    %230 = vmatprep.mubr.f32.mxu0 0.0
    %231 = vmatmul.mubr.f32.gmra.mxu0 %v164
    %v232 = vpop.f32.mrf.mxu0
    %v233 = vadd.f32 %v160, %v232
    %v234 = vpop.f32.mrf.mxu0
    %235 = vdwg.mxu0
    %236 = vst [vmem:[#allocation8] sm:$0xff] %v233
    // Predicated region
    $region34: #{tpu_custom_call.1} parent=1 // pred_check
      _
    $region35: #{tpu_custom_call.1} parent=1 // pred_check_branch
      %238 = sbr.rel (0) target = $region37
    $region36: #{tpu_custom_call.1} parent=1 // pred_region
      %s240 = ssub.s32 128, 128
      %241 = vsyncadd [#allocation4], %s240
      %s243 = sshll.u32 [#allocation8], 4
      %s244 = int_to_ptr.vmem [resolvable:$true] %s243
      %246 = dma.vmem_to_hbm [thread:$0]  %s244, 128, %s5, [#allocation4]
    $region37: #{tpu_custom_call.1} parent=1 // pred_fallthru
      _
    // Predicated region
    $region38: #{tpu_custom_call.1} parent=1 // pred_check
      _
    $region39: #{tpu_custom_call.1} parent=1 // pred_check_branch
      %248 = sbr.rel (0) target = $region41
    $region40: #{tpu_custom_call.1} parent=1 // pred_region
      %249 = dma.done [#allocation4], 128
    $region41: #{tpu_custom_call.1} parent=1 // pred_fallthru
      _
    %250 = vsyncpa [#allocation3], 1
    %251 = vsyncpa [#allocation6], 1
    %252 = vsyncpa [#allocation4], 1

</llo_original>
